<compile_context>
chip_gen: v7x
topology: tpu7x:2x2x1
jax: 0.10.0
libtpu: 0.0.40
codegen_flags: <defaults>
</compile_context>

<pallas_src>
import jax
import jax.numpy as jnp
from jax.experimental import pallas as pl
from jax.experimental.pallas import tpu as pltpu


def _cdiv(a, b):
    return (a + b - 1) // b


def _round_up(x, m):
    return _cdiv(x, m) * m


def edge_decoder_kernel(hs_ref, hd_ref, ws_ref, wd_ref, b_ref, wf_ref, bf_ref,
                        o_ref):
    # hs_ref, hd_ref : (tm, PD)   -- tile of (packed) edges; rows independent
    # ws_ref, wd_ref : (PD, PD)   -- (block-diagonal) pre-transposed weights
    # b_ref          : (1, PD)    -- folded bias (b_src + b_dst), tiled P times
    # wf_ref         : (PD, P)    -- block-diagonal final-projection columns
    # bf_ref         : (1, P)     -- final bias broadcast over the P edge slots
    # o_ref          : (tm, P)    -- P edge scores per packed row
    h = (jnp.dot(hs_ref[...], ws_ref[...], preferred_element_type=jnp.float32)
         + jnp.dot(hd_ref[...], wd_ref[...], preferred_element_type=jnp.float32)
         + b_ref[...])
    h = jnp.maximum(h, 0.0)                                   # ReLU, f32
    out = jnp.dot(h, wf_ref[...],
                  preferred_element_type=jnp.float32) + bf_ref[...]
    o_ref[...] = out.astype(o_ref.dtype)


def _select_tile(rows, pd, p, itemsize=4):
    """Pick an edge-row tile size and an explicit scoped-VMEM limit."""
    # Resident operands (constant index_map => fetched once, but still allocated
    # with two buffers by the pipeline).
    weight_bytes = 2 * 2 * pd * pd * itemsize
    small_bytes = 2 * (pd + pd * p + p) * itemsize
    # Keep total scoped VMEM comfortably inside every generation's budget
    # (v5e 16 MiB default is overridden below; v7x physical VMEM is 64 MiB).
    input_budget = max(4 << 20, (40 << 20) - weight_bytes)
    # 2 edge streams x 2 pipeline buffers x tm x pd x itemsize <= input_budget
    tm_cap = max(8, (input_budget // (2 * 2 * pd * itemsize)) // 8 * 8)
    # At least ~4 grid steps when possible so dimension_semantics=("parallel",)
    # actually shards across v7x's two TensorCores and each core still pipelines.
    tm = max(8, min(tm_cap, _round_up(_cdiv(rows, 4), 8)))
    if rows < tm:          # tiny inputs: block dims equal full array dims
        tm = rows
    footprint = (weight_bytes + small_bytes
                 + 2 * 2 * tm * pd * itemsize      # two edge streams, 2 buffers
                 + 2 * tm * p * itemsize)          # output, 2 buffers
    vmem_limit = min(max(footprint + (4 << 20), 16 << 20), 48 << 20)
    return tm, vmem_limit


def edge_linear_decoder(h_src, h_dst, params):
    """Pallas implementation of EdgeLinearDecoder.forward (eval mode)."""
    E, D = h_src.shape
    dtype = h_src.dtype

    # Lane packing factor: P edges per 128-lane row when D divides 128 evenly
    # and no padding would be needed.  P == 1 is the plain (unpacked) layout.
    if D <= 64 and 128 % D == 0 and E % (128 // D) == 0 and E >= (128 // D):
        P = 128 // D
    else:
        P = 1
    PD = P * D
    rows = E // P

    # Free row-major views: P consecutive edges share one 128-lane row.
    hs = h_src.reshape(rows, PD)
    hd = h_dst.reshape(rows, PD)

    # One-time host-side parameter prep (glue): transpose to (in, out), fold the
    # two first-layer biases, expand to block-diagonal packed form (P may be 1).
    eye = jnp.eye(P, dtype=dtype)
    ws_t = jnp.kron(eye, params["w_src"].T.astype(dtype))          # (PD, PD)
    wd_t = jnp.kron(eye, params["w_dst"].T.astype(dtype))          # (PD, PD)
    b = jnp.tile((params["b_src"] + params["b_dst"]).astype(dtype),
                 P).reshape(1, PD)                                 # (1, PD)
    wf = jnp.kron(eye, params["w_final"].T.astype(dtype))          # (PD, P)
    bf = jnp.tile(params["b_final"].astype(dtype).reshape(1, 1), (1, P))

    tm, vmem_limit = _select_tile(rows, PD, P, itemsize=jnp.dtype(dtype).itemsize)
    grid = (_cdiv(rows, tm),)          # partial last block handled by Pallas

    edge_spec = pl.BlockSpec((tm, PD), lambda i: (i, 0))
    full = lambda r, c: pl.BlockSpec((r, c), lambda i: (0, 0))

    out = pl.pallas_call(
        edge_decoder_kernel,
        out_shape=jax.ShapeDtypeStruct((rows, P), dtype),
        grid_spec=pltpu.PrefetchScalarGridSpec(
            num_scalar_prefetch=0,
            grid=grid,
            in_specs=[
                edge_spec,              # h_src tile (packed)
                edge_spec,              # h_dst tile (packed)
                full(PD, PD),           # W_src^T (block-diagonal)
                full(PD, PD),           # W_dst^T (block-diagonal)
                full(1, PD),            # b_src + b_dst (tiled)
                full(PD, P),            # W_final (block-diagonal columns)
                full(1, P),             # b_final (broadcast)
            ],
            out_specs=pl.BlockSpec((tm, P), lambda i: (i, 0)),
        ),
        compiler_params=pltpu.CompilerParams(
            dimension_semantics=("parallel",),
            vmem_limit_bytes=vmem_limit),
    )(hs, hd, ws_t, wd_t, b, wf, bf)

    return out.reshape(E, 1)


def init_params(key, in_dim, dtype=jnp.float32):
    """Deterministic synthetic parameters matching nn.Linear shapes."""
    ks = jax.random.split(key, 6)
    scale = 1.0 / jnp.sqrt(jnp.asarray(in_dim, dtype))
    return {
        # nn.Linear(in_dim, in_dim): weight (out, in), bias (out,)
        "w_src": jax.random.uniform(ks[0], (in_dim, in_dim), dtype, -scale, scale),
        "b_src": jax.random.uniform(ks[1], (in_dim,), dtype, -scale, scale),
        "w_dst": jax.random.uniform(ks[2], (in_dim, in_dim), dtype, -scale, scale),
        "b_dst": jax.random.uniform(ks[3], (in_dim,), dtype, -scale, scale),
        # nn.Linear(in_dim, 1): weight (1, in_dim), bias (1,)
        "w_final": jax.random.uniform(ks[4], (1, in_dim), dtype, -scale, scale),
        "b_final": jax.random.uniform(ks[5], (1,), dtype, -scale, scale),
    }


def reference(h_src, h_dst, p):
    h = (h_src @ p["w_src"].T + p["b_src"]
         + h_dst @ p["w_dst"].T + p["b_dst"])
    h = jnp.maximum(h, 0.0)
    return h @ p["w_final"].T + p["b_final"]


if __name__ == "__main__":
    key = jax.random.PRNGKey(0)

    def run_case(E, D, case_key):
        k_src, k_dst, k_par = jax.random.split(case_key, 3)
        h_src = jax.random.normal(k_src, (E, D), jnp.float32)
        h_dst = jax.random.normal(k_dst, (E, D), jnp.float32)
        params = init_params(k_par, D)
        out = jax.block_until_ready(edge_linear_decoder(h_src, h_dst, params))
        ref = reference(h_src, h_dst, params)
        assert out.shape == (E, 1)
        err = float(jnp.max(jnp.abs(out - ref)))
        assert jnp.allclose(out, ref, atol=1e-4, rtol=1e-4), err

    k1, k2 = jax.random.split(key)
    # Packed path (P = 4, D = 32), non-divisible row count -> partial last block.
    run_case(1000, 32, k1)
    # Unpacked fallback (P = 1, D = 48), partial last block.
    run_case(77, 48, k2)
    print("KERNEL_OK")
</pallas_src>

<mosaic_0001>
module attributes {stable_mosaic.version = 11 : i64} {
  func.func @edge_decoder_kernel(%arg0: i32, %arg1: memref<64x128xf32, #tpu.memory_space<vmem>>, %arg2: memref<64x128xf32, #tpu.memory_space<vmem>>, %arg3: memref<128x128xf32, #tpu.memory_space<vmem>>, %arg4: memref<128x128xf32, #tpu.memory_space<vmem>>, %arg5: memref<1x128xf32, #tpu.memory_space<vmem>>, %arg6: memref<128x4xf32, #tpu.memory_space<vmem>>, %arg7: memref<1x4xf32, #tpu.memory_space<vmem>>, %arg8: memref<64x4xf32, #tpu.memory_space<vmem>>) attributes {dimension_semantics = [#tpu.dimension_semantics<parallel>], iteration_bounds = array<i64: 4>, scalar_prefetch = 0 : i64, scratch_operands = 0 : i64, tpu.core_type = #tpu.core_type<tc>, window_params = [{transform_indices = @transform_0, window_bounds = array<i64: 64, 128>}, {transform_indices = @transform_1, window_bounds = array<i64: 64, 128>}, {pipeline_mode = #tpu.pipeline_mode<synchronous>, transform_indices = @transform_2, window_bounds = array<i64: 128, 128>}, {pipeline_mode = #tpu.pipeline_mode<synchronous>, transform_indices = @transform_3, window_bounds = array<i64: 128, 128>}, {pipeline_mode = #tpu.pipeline_mode<synchronous>, transform_indices = @transform_4, window_bounds = array<i64: 1, 128>}, {pipeline_mode = #tpu.pipeline_mode<synchronous>, transform_indices = @transform_5, window_bounds = array<i64: 128, 4>}, {pipeline_mode = #tpu.pipeline_mode<synchronous>, transform_indices = @transform_6, window_bounds = array<i64: 1, 4>}, {transform_indices = @transform_7, window_bounds = array<i64: 64, 4>}]} {
    %c0 = arith.constant 0 : index
    %c0_0 = arith.constant 0 : index
    %0 = vector.load %arg1[%c0, %c0_0] : memref<64x128xf32, #tpu.memory_space<vmem>>, vector<64x128xf32>
    %c0_1 = arith.constant 0 : index
    %c0_2 = arith.constant 0 : index
    %1 = vector.load %arg3[%c0_1, %c0_2] : memref<128x128xf32, #tpu.memory_space<vmem>>, vector<128x128xf32>
    %cst = arith.constant dense<0.000000e+00> : vector<64x128xf32>
    %2 = tpu.matmul %0, %1, %cst {dimension_numbers = #tpu.dot_dimension_numbers<[1], [0], [0], [1], [0, 0, 1, 1], [], []>} : vector<64x128xf32>, vector<128x128xf32>, vector<64x128xf32> -> vector<64x128xf32>
    %c0_3 = arith.constant 0 : index
    %c0_4 = arith.constant 0 : index
    %3 = vector.load %arg2[%c0_3, %c0_4] : memref<64x128xf32, #tpu.memory_space<vmem>>, vector<64x128xf32>
    %c0_5 = arith.constant 0 : index
    %c0_6 = arith.constant 0 : index
    %4 = vector.load %arg4[%c0_5, %c0_6] : memref<128x128xf32, #tpu.memory_space<vmem>>, vector<128x128xf32>
    %cst_7 = arith.constant dense<0.000000e+00> : vector<64x128xf32>
    %5 = tpu.matmul %3, %4, %cst_7 {dimension_numbers = #tpu.dot_dimension_numbers<[1], [0], [0], [1], [0, 0, 1, 1], [], []>} : vector<64x128xf32>, vector<128x128xf32>, vector<64x128xf32> -> vector<64x128xf32>
    %6 = arith.addf %2, %5 : vector<64x128xf32>
    %c0_8 = arith.constant 0 : index
    %c0_9 = arith.constant 0 : index
    %7 = vector.load %arg5[%c0_8, %c0_9] : memref<1x128xf32, #tpu.memory_space<vmem>>, vector<1x128xf32>
    %8 = vector.broadcast %7 : vector<1x128xf32> to vector<64x128xf32>
    %9 = arith.addf %6, %8 : vector<64x128xf32>
    %cst_10 = arith.constant 0.000000e+00 : f32
    %10 = vector.broadcast %cst_10 : f32 to vector<64x128xf32>
    %11 = arith.maximumf %9, %10 : vector<64x128xf32>
    %c0_11 = arith.constant 0 : index
    %c0_12 = arith.constant 0 : index
    %12 = vector.load %arg6[%c0_11, %c0_12] : memref<128x4xf32, #tpu.memory_space<vmem>>, vector<128x4xf32>
    %cst_13 = arith.constant dense<0.000000e+00> : vector<64x4xf32>
    %13 = tpu.matmul %11, %12, %cst_13 {dimension_numbers = #tpu.dot_dimension_numbers<[1], [0], [0], [1], [0, 0, 1, 1], [], []>} : vector<64x128xf32>, vector<128x4xf32>, vector<64x4xf32> -> vector<64x4xf32>
    %c0_14 = arith.constant 0 : index
    %c0_15 = arith.constant 0 : index
    %14 = vector.load %arg7[%c0_14, %c0_15] : memref<1x4xf32, #tpu.memory_space<vmem>>, vector<1x4xf32>
    %15 = vector.broadcast %14 : vector<1x4xf32> to vector<64x4xf32>
    %16 = arith.addf %13, %15 : vector<64x4xf32>
    %c0_16 = arith.constant 0 : index
    %c0_17 = arith.constant 0 : index
    %17 = vector.load %arg8[%c0_16, %c0_17] : memref<64x4xf32, #tpu.memory_space<vmem>>, vector<64x4xf32>
    tpu.vector_store %arg8[%c0_16, %c0_17], %16 {strides = array<i32>} : memref<64x4xf32, #tpu.memory_space<vmem>>, vector<64x4xf32>,
    return
  }
  func.func @transform_0(%arg0: i32) -> (i32, i32) {
    %c0_i32 = arith.constant 0 : i32
    %c0_i32_0 = arith.constant 0 : i32
    return %arg0, %c0_i32 : i32, i32
  }
  func.func @transform_1(%arg0: i32) -> (i32, i32) {
    %c0_i32 = arith.constant 0 : i32
    %c0_i32_0 = arith.constant 0 : i32
    return %arg0, %c0_i32 : i32, i32
  }
  func.func @transform_2(%arg0: i32) -> (i32, i32) {
    %c0_i32 = arith.constant 0 : i32
    %c0_i32_0 = arith.constant 0 : i32
    %c0_i32_1 = arith.constant 0 : i32
    return %c0_i32, %c0_i32_0 : i32, i32
  }
  func.func @transform_3(%arg0: i32) -> (i32, i32) {
    %c0_i32 = arith.constant 0 : i32
    %c0_i32_0 = arith.constant 0 : i32
    %c0_i32_1 = arith.constant 0 : i32
    return %c0_i32, %c0_i32_0 : i32, i32
  }
  func.func @transform_4(%arg0: i32) -> (i32, i32) {
    %c0_i32 = arith.constant 0 : i32
    %c0_i32_0 = arith.constant 0 : i32
    %c0_i32_1 = arith.constant 0 : i32
    return %c0_i32, %c0_i32_0 : i32, i32
  }
  func.func @transform_5(%arg0: i32) -> (i32, i32) {
    %c0_i32 = arith.constant 0 : i32
    %c0_i32_0 = arith.constant 0 : i32
    %c0_i32_1 = arith.constant 0 : i32
    return %c0_i32, %c0_i32_0 : i32, i32
  }
  func.func @transform_6(%arg0: i32) -> (i32, i32) {
    %c0_i32 = arith.constant 0 : i32
    %c0_i32_0 = arith.constant 0 : i32
    %c0_i32_1 = arith.constant 0 : i32
    return %c0_i32, %c0_i32_0 : i32, i32
  }
  func.func @transform_7(%arg0: i32) -> (i32, i32) {
    %c0_i32 = arith.constant 0 : i32
    %c0_i32_0 = arith.constant 0 : i32
    return %arg0, %c0_i32 : i32, i32
  }
}

</mosaic_0001>

<llo_original>
// kernel: tpu_custom_call.1
$region0: #{tpu_custom_call.1}
  #allocation0 [shape = 'u32[]', space=smem, size = 0x4, offset = 0x4, fixed_abs, tag = 'smem constant byte address 0x4 - core index']
  #allocation1 [shape = 'u32[144,128]{1,0:T(1,128)}', space=vmem, size = 0x12000, scoped, tag = 'internal scratch']
  %s0 = inlined_call_operand.hbm [shape: f32[250,128], index: 0, kind: input, shape index: {}]
  %s1 = inlined_call_operand.hbm [shape: f32[250,128], index: 1, kind: input, shape index: {}]
  %s2 = inlined_call_operand.vmem [shape: f32[128,128], index: 2, kind: input, shape index: {}]
  %s3 = inlined_call_operand.hbm [shape: f32[128,128], index: 3, kind: input, shape index: {}]
  %s4 = inlined_call_operand.vmem [shape: f32[1,128], index: 4, kind: input, shape index: {}]
  %s5 = inlined_call_operand.vmem [shape: f32[128,4], index: 5, kind: input, shape index: {}]
  %s6 = inlined_call_operand.vmem [shape: f32[1,4], index: 6, kind: input, shape index: {}]
  %s7 = inlined_call_operand.vmem [shape: f32[250,4], index: 7, kind: output, shape index: {}]
  %s8 = sld [smem:[#allocation0]]
  $region73: #{tpu_custom_call.1} parent=0
    _
  %s10 = ssub.s32 1, %s8
  %s11 = scalar_select 0, %s10, %s8
  $region1: #{tpu_custom_call.1} parent=0
    #allocation2 [shape = 'u8[65536]{0}', space=vmem, size = 0x10000, scoped, tag = 'input window, operand 0']
    #allocation3 [shape = 's32[2]{0}', space=sflag, size = 0x8, scoped, tag = 'scoped memory for tpu_custom_call.1']
    #allocation4 [shape = 'u8[65536]{0}', space=vmem, size = 0x10000, scoped, tag = 'input window, operand 1']
    #allocation5 [shape = 's32[2]{0}', space=sflag, size = 0x8, scoped, tag = 'scoped memory for tpu_custom_call.1']
    #allocation6 [shape = 'u8[65536]{0}', space=vmem, size = 0x10000, scoped, tag = 'input window, operand 3, single buffered']
    %12 = vsyncpa [#allocation3], 0
    %s13 = scalar_lea.sflag [#allocation3], 1
    %14 = vsyncpa %s13, 0
    %15 = vsyncpa [#allocation5], 0
    %s16 = scalar_lea.sflag [#allocation5], 1
    %17 = vsyncpa %s16, 0
    loop: start=0, step=1, limit=6
    $region2: #{tpu_custom_call.1} parent=1 // loop_pre_header
      _
    $region3: #{tpu_custom_call.1} parent=1 // loop_header
      %s19 = sphi 0, %s23
      %p20 = scmp.ge.s32.totalorder %s19, 6
      %s29 = sphi 0, %s31
      %s32 = sphi 0, %s29
      %s33 = sphi 0, %s32
      %s49 = sphi 0, %s33
      %s55 = sphi 0, %s57
      %s58 = sphi 0, %s55
      %s59 = sphi 0, %s58
      %s75 = sphi 0, %s59
      %s79 = sphi 0, %s79
      %s81 = sphi 0, %s79
      %s82 = sphi 0, %s81
      %s96 = sphi 0, %s82
      %s100 = sphi 0, %s100
      %s102 = sphi 0, %s100
      %s103 = sphi 0, %s102
      %s117 = sphi 0, %s103
      %s121 = sphi 0, %s121
      %s123 = sphi 0, %s121
      %s124 = sphi 0, %s123
      %s138 = sphi 0, %s124
      %s142 = sphi 0, %s142
      %s144 = sphi 0, %s142
      %s145 = sphi 0, %s144
      %s159 = sphi 0, %s145
      %s163 = sphi 0, %s163
      %s165 = sphi 0, %s163
      %s166 = sphi 0, %s165
      %s180 = sphi 0, %s166
      %s186 = sphi 0, %s188
      %s189 = sphi 0, %s186
      %s190 = sphi 0, %s189
      %s206 = sphi 0, %s190
    $region4: #{tpu_custom_call.1} parent=1 // loop_header_branch
      %22 = sbr.rel (%p20) target = $region8
    $region5: #{tpu_custom_call.1} parent=1 // loop_body
      %s24 = ssub.s32 %s19, 1
      %s25 = ssub.s32 %s19, 2
      %s26 = sadd.s32 %s19, 1
      %s27 = ssub.s32 %s19, %s26
      %p28 = scmp.eq.s32.totalorder %s27, 0
      %s30 = sadd.s32 %s29, 1
      %s31 = scalar_select %p28, %s29, %s30
      %p34 = pneg %p28
      %p35 = scmp.eq.s32.totalorder %s19, 3
      %p36 = por %p34, %p35
      %p37 = scmp.ne.s32.totalorder %s29, %s32
      %p38 = scmp.eq.s32.totalorder %s19, 0
      %p39 = por %p37, %p38
      %p40 = scmp.ne.s32.totalorder %s29, %s32
      %p41 = scmp.eq.s32.totalorder %s24, 3
      %p42 = por %p40, %p41
      %p43 = scmp.ne.s32.totalorder %s32, %s33
      %p44 = scmp.eq.s32.totalorder %s24, 0
      %p45 = por %p43, %p44
      %p46 = scmp.ne.s32.totalorder %s32, %s33
      %p47 = scmp.eq.s32.totalorder %s25, 3
      %p48 = por %p46, %p47
      %p50 = scmp.ne.s32.totalorder %s33, %s49
      %p51 = scmp.eq.s32.totalorder %s25, 0
      %p52 = por %p50, %p51
      %s53 = ssub.s32 %s19, %s26
      %p54 = scmp.eq.s32.totalorder %s53, 0
      %s56 = sadd.s32 %s55, 1
      %s57 = scalar_select %p54, %s55, %s56
      %p60 = pneg %p54
      %p61 = scmp.eq.s32.totalorder %s19, 3
      %p62 = por %p60, %p61
      %p63 = scmp.ne.s32.totalorder %s55, %s58
      %p64 = scmp.eq.s32.totalorder %s19, 0
      %p65 = por %p63, %p64
      %p66 = scmp.ne.s32.totalorder %s55, %s58
      %p67 = scmp.eq.s32.totalorder %s24, 3
      %p68 = por %p66, %p67
      %p69 = scmp.ne.s32.totalorder %s58, %s59
      %p70 = scmp.eq.s32.totalorder %s24, 0
      %p71 = por %p69, %p70
      %p72 = scmp.ne.s32.totalorder %s58, %s59
      %p73 = scmp.eq.s32.totalorder %s25, 3
      %p74 = por %p72, %p73
      %p76 = scmp.ne.s32.totalorder %s59, %s75
      %p77 = scmp.eq.s32.totalorder %s25, 0
      %p78 = por %p76, %p77
      %s80 = sadd.s32 %s79, 1
      %p83 = scmp.eq.s32.totalorder %s19, 3
      %p84 = scmp.ne.s32.totalorder %s79, %s81
      %p85 = scmp.eq.s32.totalorder %s19, 0
      %p86 = por %p84, %p85
      %p87 = scmp.ne.s32.totalorder %s79, %s81
      %p88 = scmp.eq.s32.totalorder %s24, 3
      %p89 = por %p87, %p88
      %p90 = scmp.ne.s32.totalorder %s81, %s82
      %p91 = scmp.eq.s32.totalorder %s24, 0
      %p92 = por %p90, %p91
      %p93 = scmp.ne.s32.totalorder %s81, %s82
      %p94 = scmp.eq.s32.totalorder %s25, 3
      %p95 = por %p93, %p94
      %p97 = scmp.ne.s32.totalorder %s82, %s96
      %p98 = scmp.eq.s32.totalorder %s25, 0
      %p99 = por %p97, %p98
      %s101 = sadd.s32 %s100, 1
      %p104 = scmp.eq.s32.totalorder %s19, 3
      %p105 = scmp.ne.s32.totalorder %s100, %s102
      %p106 = scmp.eq.s32.totalorder %s19, 0
      %p107 = por %p105, %p106
      %p108 = scmp.ne.s32.totalorder %s100, %s102
      %p109 = scmp.eq.s32.totalorder %s24, 3
      %p110 = por %p108, %p109
      %p111 = scmp.ne.s32.totalorder %s102, %s103
      %p112 = scmp.eq.s32.totalorder %s24, 0
      %p113 = por %p111, %p112
      %p114 = scmp.ne.s32.totalorder %s102, %s103
      %p115 = scmp.eq.s32.totalorder %s25, 3
      %p116 = por %p114, %p115
      %p118 = scmp.ne.s32.totalorder %s103, %s117
      %p119 = scmp.eq.s32.totalorder %s25, 0
      %p120 = por %p118, %p119
      %s122 = sadd.s32 %s121, 1
      %p125 = scmp.eq.s32.totalorder %s19, 3
      %p126 = scmp.ne.s32.totalorder %s121, %s123
      %p127 = scmp.eq.s32.totalorder %s19, 0
      %p128 = por %p126, %p127
      %p129 = scmp.ne.s32.totalorder %s121, %s123
      %p130 = scmp.eq.s32.totalorder %s24, 3
      %p131 = por %p129, %p130
      %p132 = scmp.ne.s32.totalorder %s123, %s124
      %p133 = scmp.eq.s32.totalorder %s24, 0
      %p134 = por %p132, %p133
      %p135 = scmp.ne.s32.totalorder %s123, %s124
      %p136 = scmp.eq.s32.totalorder %s25, 3
      %p137 = por %p135, %p136
      %p139 = scmp.ne.s32.totalorder %s124, %s138
      %p140 = scmp.eq.s32.totalorder %s25, 0
      %p141 = por %p139, %p140
      %s143 = sadd.s32 %s142, 1
      %p146 = scmp.eq.s32.totalorder %s19, 3
      %p147 = scmp.ne.s32.totalorder %s142, %s144
      %p148 = scmp.eq.s32.totalorder %s19, 0
      %p149 = por %p147, %p148
      %p150 = scmp.ne.s32.totalorder %s142, %s144
      %p151 = scmp.eq.s32.totalorder %s24, 3
      %p152 = por %p150, %p151
      %p153 = scmp.ne.s32.totalorder %s144, %s145
      %p154 = scmp.eq.s32.totalorder %s24, 0
      %p155 = por %p153, %p154
      %p156 = scmp.ne.s32.totalorder %s144, %s145
      %p157 = scmp.eq.s32.totalorder %s25, 3
      %p158 = por %p156, %p157
      %p160 = scmp.ne.s32.totalorder %s145, %s159
      %p161 = scmp.eq.s32.totalorder %s25, 0
      %p162 = por %p160, %p161
      %s164 = sadd.s32 %s163, 1
      %p167 = scmp.eq.s32.totalorder %s19, 3
      %p168 = scmp.ne.s32.totalorder %s163, %s165
      %p169 = scmp.eq.s32.totalorder %s19, 0
      %p170 = por %p168, %p169
      %p171 = scmp.ne.s32.totalorder %s163, %s165
      %p172 = scmp.eq.s32.totalorder %s24, 3
      %p173 = por %p171, %p172
      %p174 = scmp.ne.s32.totalorder %s165, %s166
      %p175 = scmp.eq.s32.totalorder %s24, 0
      %p176 = por %p174, %p175
      %p177 = scmp.ne.s32.totalorder %s165, %s166
      %p178 = scmp.eq.s32.totalorder %s25, 3
      %p179 = por %p177, %p178
      %p181 = scmp.ne.s32.totalorder %s166, %s180
      %p182 = scmp.eq.s32.totalorder %s25, 0
      %p183 = por %p181, %p182
      %s184 = ssub.s32 %s19, %s26
      %p185 = scmp.eq.s32.totalorder %s184, 0
      %s187 = sadd.s32 %s186, 1
      %s188 = scalar_select %p185, %s186, %s187
      %p191 = pneg %p185
      %p192 = scmp.eq.s32.totalorder %s19, 3
      %p193 = por %p191, %p192
      %p194 = scmp.ne.s32.totalorder %s186, %s189
      %p195 = scmp.eq.s32.totalorder %s19, 0
      %p196 = por %p194, %p195
      %p197 = scmp.ne.s32.totalorder %s186, %s189
      %p198 = scmp.eq.s32.totalorder %s24, 3
      %p199 = por %p197, %p198
      %p200 = scmp.ne.s32.totalorder %s189, %s190
      %p201 = scmp.eq.s32.totalorder %s24, 0
      %p202 = por %p200, %p201
      %p203 = scmp.ne.s32.totalorder %s189, %s190
      %p204 = scmp.eq.s32.totalorder %s25, 3
      %p205 = por %p203, %p204
      %p207 = scmp.ne.s32.totalorder %s190, %s206
      %p208 = scmp.eq.s32.totalorder %s25, 0
      %p209 = por %p207, %p208
      %p210 = scmp.le.s32.totalorder 1, %s19
      %p211 = scmp.lt.s32.totalorder %s19, 5
      %p212 = pnand %p210, %p211
      %p213 = pneg %p212
      // Predicated region
      $region9: #{tpu_custom_call.1} parent=5 // pred_check
        _
      $region10: #{tpu_custom_call.1} parent=5 // pred_check_branch
        %215 = sbr.rel (%p212) target = $region12
      $region11: #{tpu_custom_call.1} parent=5 // pred_region
        %s216 = ssub.s32 %s19, 1
        // Predicated region
        $region13: #{tpu_custom_call.1} parent=11 // pred_check
          %p217 = pneg %p92
        $region14: #{tpu_custom_call.1} parent=11 // pred_check_branch
          %219 = sbr.rel (%p217) target = $region16
        $region15: #{tpu_custom_call.1} parent=11 // pred_region
          _
        $region16: #{tpu_custom_call.1} parent=11 // pred_fallthru
          _
        // Predicated region
        $region17: #{tpu_custom_call.1} parent=11 // pred_check
          %p220 = pneg %p113
        $region18: #{tpu_custom_call.1} parent=11 // pred_check_branch
          %222 = sbr.rel (%p220) target = $region20
        $region19: #{tpu_custom_call.1} parent=11 // pred_region
          %s224 = ssub.s32 2048, 2048
          %225 = vsyncadd [#allocation5], %s224
          %s226 = sshll.u32 [#allocation6], 4
          %s227 = int_to_ptr.vmem [resolvable:$true] %s226
          %232 = dma.hbm_to_vmem [thread:$0]  %s3, 2048, %s227, [#allocation5], 128, 128, 8
        $region20: #{tpu_custom_call.1} parent=11 // pred_fallthru
          _
        // Predicated region
        $region21: #{tpu_custom_call.1} parent=11 // pred_check
          %p233 = pneg %p134
        $region22: #{tpu_custom_call.1} parent=11 // pred_check_branch
          %235 = sbr.rel (%p233) target = $region24
        $region23: #{tpu_custom_call.1} parent=11 // pred_region
          _
        $region24: #{tpu_custom_call.1} parent=11 // pred_fallthru
          _
        // Predicated region
        $region25: #{tpu_custom_call.1} parent=11 // pred_check
          %p236 = pneg %p155
        $region26: #{tpu_custom_call.1} parent=11 // pred_check_branch
          %238 = sbr.rel (%p236) target = $region28
        $region27: #{tpu_custom_call.1} parent=11 // pred_region
          _
        $region28: #{tpu_custom_call.1} parent=11 // pred_fallthru
          _
        // Predicated region
        $region29: #{tpu_custom_call.1} parent=11 // pred_check
          %p239 = pneg %p176
        $region30: #{tpu_custom_call.1} parent=11 // pred_check_branch
          %241 = sbr.rel (%p239) target = $region32
        $region31: #{tpu_custom_call.1} parent=11 // pred_region
          _
        $region32: #{tpu_custom_call.1} parent=11 // pred_fallthru
          _
      $region12: #{tpu_custom_call.1} parent=5 // pred_fallthru
        _
      %p242 = scmp.lt.s32.totalorder %s19, 4
      // Predicated region
      $region33: #{tpu_custom_call.1} parent=5 // pred_check
        %p243 = pneg %p242
      $region34: #{tpu_custom_call.1} parent=5 // pred_check_branch
        %245 = sbr.rel (%p243) target = $region36
      $region35: #{tpu_custom_call.1} parent=5 // pred_region
        // Predicated region
        $region37: #{tpu_custom_call.1} parent=35 // pred_check
          %p246 = pneg %p39
        $region38: #{tpu_custom_call.1} parent=35 // pred_check_branch
          %248 = sbr.rel (%p246) target = $region40
        $region39: #{tpu_custom_call.1} parent=35 // pred_region
          %s249 = sand.u32 %s29, 1
          %s250 = scalar_lea.sflag [#allocation3], %s249
          %s251 = sand.u32 %s29, 1
          %s252 = smul.addr %s251, 64
          %s253 = scalar_lea.vmem [#allocation2], %s252
          %s254 = smul.u32 8, %s19
          %s256 = ssub.s32 1024, 1024
          %257 = vsyncadd %s250, %s256
          %s258 = smul.addr %s254, 128
          %s259 = scalar_lea.hbm %s0, %s258
          %s260 = sshll.u32 %s253, 4
          %s261 = int_to_ptr.vmem [resolvable:$true] %s260
          %266 = dma.hbm_to_vmem [thread:$0]  %s259, 1024, %s261, %s250, 128, 128, 8
        $region40: #{tpu_custom_call.1} parent=35 // pred_fallthru
          _
        // Predicated region
        $region41: #{tpu_custom_call.1} parent=35 // pred_check
          %p267 = pneg %p65
        $region42: #{tpu_custom_call.1} parent=35 // pred_check_branch
          %269 = sbr.rel (%p267) target = $region44
        $region43: #{tpu_custom_call.1} parent=35 // pred_region
          %s270 = sand.u32 %s19, 1
          %s271 = scalar_lea.sflag [#allocation5], %s270
          %s272 = sand.u32 %s55, 1
          %s273 = smul.addr %s272, 64
          %s274 = scalar_lea.vmem [#allocation4], %s273
          %s275 = smul.u32 8, %s19
          %s277 = ssub.s32 1024, 1024
          %278 = vsyncadd %s271, %s277
          %s279 = smul.addr %s275, 128
          %s280 = scalar_lea.hbm %s1, %s279
          %s281 = sshll.u32 %s274, 4
          %s282 = int_to_ptr.vmem [resolvable:$true] %s281
          %287 = dma.hbm_to_vmem [thread:$0]  %s280, 1024, %s282, %s271, 128, 128, 8
        $region44: #{tpu_custom_call.1} parent=35 // pred_fallthru
          _
      $region36: #{tpu_custom_call.1} parent=5 // pred_fallthru
        _
      %p288 = scmp.le.s32.totalorder 1, %s19
      %p289 = scmp.lt.s32.totalorder %s19, 5
      %p290 = pnand %p288, %p289
      %p291 = pneg %p290
      // Predicated region
      $region45: #{tpu_custom_call.1} parent=5 // pred_check
        _
      $region46: #{tpu_custom_call.1} parent=5 // pred_check_branch
        %293 = sbr.rel (%p290) target = $region48
      $region47: #{tpu_custom_call.1} parent=5 // pred_region
        %s294 = ssub.s32 %s19, 1
        %s295 = sand.u32 %s32, 1
        %s296 = scalar_lea.sflag [#allocation3], %s295
        %s297 = sand.u32 %s32, 1
        %s298 = smul.addr %s297, 64
        %s299 = scalar_lea.vmem [#allocation2], %s298
        // Predicated region
        $region49: #{tpu_custom_call.1} parent=47 // pred_check
          %p300 = pneg %p45
        $region50: #{tpu_custom_call.1} parent=47 // pred_check_branch
          %302 = sbr.rel (%p300) target = $region52
        $region51: #{tpu_custom_call.1} parent=47 // pred_region
          %303 = dma.done %s296, 1024
        $region52: #{tpu_custom_call.1} parent=47 // pred_fallthru
          _
        %s304 = sand.u32 %s24, 1
        %s305 = scalar_lea.sflag [#allocation5], %s304
        %s306 = sand.u32 %s58, 1
        %s307 = smul.addr %s306, 64
        %s308 = scalar_lea.vmem [#allocation4], %s307
        // Predicated region
        $region53: #{tpu_custom_call.1} parent=47 // pred_check
          %p309 = pneg %p71
        $region54: #{tpu_custom_call.1} parent=47 // pred_check_branch
          %311 = sbr.rel (%p309) target = $region56
        $region55: #{tpu_custom_call.1} parent=47 // pred_region
          %312 = dma.done %s305, 1024
        $region56: #{tpu_custom_call.1} parent=47 // pred_fallthru
          _
        // Predicated region
        $region57: #{tpu_custom_call.1} parent=47 // pred_check
          %p313 = pneg %p113
        $region58: #{tpu_custom_call.1} parent=47 // pred_check_branch
          %315 = sbr.rel (%p313) target = $region60
        $region59: #{tpu_custom_call.1} parent=47 // pred_region
          %316 = dma.done [#allocation5], 2048
        $region60: #{tpu_custom_call.1} parent=47 // pred_fallthru
          _
        %s317 = sand.u32 %s32, 1
        %s318 = scalar_lea.sflag [#allocation3], %s317
        %s319 = sand.u32 %s32, 1
        %s320 = smul.addr %s319, 64
        %s321 = scalar_lea.vmem [#allocation2], %s320
        %p322 = pneg %p45
        %p323 = pneg %p42
        %s324 = sand.u32 %s24, 1
        %s325 = scalar_lea.sflag [#allocation5], %s324
        %s326 = sand.u32 %s58, 1
        %s327 = smul.addr %s326, 64
        %s328 = scalar_lea.vmem [#allocation4], %s327
        %p329 = pneg %p71
        %p330 = pneg %p68
        %p331 = pneg %p92
        %p332 = pneg %p89
        %p333 = pneg %p113
        %p334 = pneg %p110
        %p335 = pneg %p134
        %p336 = pneg %p131
        %p337 = pneg %p155
        %p338 = pneg %p152
        %p339 = pneg %p176
        %p340 = pneg %p173
        %p341 = pneg %p202
        %p342 = pneg %p199
        %s343 = smul.u32 8, %s24
        %p344 = scmp.lt.s32.totalorder %s343, 31
        %s345 = scalar_select %p344, %s343, 31
        %s346 = smul.addr %s345, 8
        %s347 = scalar_lea.vmem %s7, %s346
        %s348 = smul.u32 8, %s24
        %s349 = smul.u32 8, %s24
        %s350 = smul.u32 8, %s24
        %p351 = scmp.lt.s32.totalorder %s350, 31
        %s352 = scalar_select %p351, %s350, 31
        %s353 = smul.addr %s352, 8
        %s354 = scalar_lea.vmem %s7, %s353
        %s355 = smul.u32 8, %s24
        %v356 = vld [vmem:[%s299] sm:$0xff]
        %v357 = vld [vmem:[%s299 + $0x8] sm:$0xff]
        %v358 = vld [vmem:[%s299 + $0x10] sm:$0xff]
        %v359 = vld [vmem:[%s299 + $0x18] sm:$0xff]
        %v360 = vld [vmem:[%s299 + $0x20] sm:$0xff]
        %v361 = vld [vmem:[%s299 + $0x28] sm:$0xff]
        %v362 = vld [vmem:[%s299 + $0x30] sm:$0xff]
        %v363 = vld [vmem:[%s299 + $0x38] sm:$0xff]
        %v364 = vld [vmem:[%s2] sm:$0xff]
        %v365 = vld [vmem:[%s2 + $0x8] sm:$0xff]
        %v366 = vld [vmem:[%s2 + $0x10] sm:$0xff]
        %v367 = vld [vmem:[%s2 + $0x18] sm:$0xff]
        %v368 = vld [vmem:[%s2 + $0x20] sm:$0xff]
        %v369 = vld [vmem:[%s2 + $0x28] sm:$0xff]
        %v370 = vld [vmem:[%s2 + $0x30] sm:$0xff]
        %v371 = vld [vmem:[%s2 + $0x38] sm:$0xff]
        %v372 = vld [vmem:[%s2 + $0x40] sm:$0xff]
        %v373 = vld [vmem:[%s2 + $0x48] sm:$0xff]
        %v374 = vld [vmem:[%s2 + $0x50] sm:$0xff]
        %v375 = vld [vmem:[%s2 + $0x58] sm:$0xff]
        %v376 = vld [vmem:[%s2 + $0x60] sm:$0xff]
        %v377 = vld [vmem:[%s2 + $0x68] sm:$0xff]
        %v378 = vld [vmem:[%s2 + $0x70] sm:$0xff]
        %v379 = vld [vmem:[%s2 + $0x78] sm:$0xff]
        %v380 = vld [vmem:[%s308] sm:$0xff]
        %v381 = vld [vmem:[%s308 + $0x8] sm:$0xff]
        %v382 = vld [vmem:[%s308 + $0x10] sm:$0xff]
        %v383 = vld [vmem:[%s308 + $0x18] sm:$0xff]
        %v384 = vld [vmem:[%s308 + $0x20] sm:$0xff]
        %v385 = vld [vmem:[%s308 + $0x28] sm:$0xff]
        %v386 = vld [vmem:[%s308 + $0x30] sm:$0xff]
        %v387 = vld [vmem:[%s308 + $0x38] sm:$0xff]
        %v388 = vld [vmem:[#allocation6] sm:$0xff]
        %v389 = vld [vmem:[#allocation6 + $0x8] sm:$0xff]
        %v390 = vld [vmem:[#allocation6 + $0x10] sm:$0xff]
        %v391 = vld [vmem:[#allocation6 + $0x18] sm:$0xff]
        %v392 = vld [vmem:[#allocation6 + $0x20] sm:$0xff]
        %v393 = vld [vmem:[#allocation6 + $0x28] sm:$0xff]
        %v394 = vld [vmem:[#allocation6 + $0x30] sm:$0xff]
        %v395 = vld [vmem:[#allocation6 + $0x38] sm:$0xff]
        %v396 = vld [vmem:[#allocation6 + $0x40] sm:$0xff]
        %v397 = vld [vmem:[#allocation6 + $0x48] sm:$0xff]
        %v398 = vld [vmem:[#allocation6 + $0x50] sm:$0xff]
        %v399 = vld [vmem:[#allocation6 + $0x58] sm:$0xff]
        %v400 = vld [vmem:[#allocation6 + $0x60] sm:$0xff]
        %v401 = vld [vmem:[#allocation6 + $0x68] sm:$0xff]
        %v402 = vld [vmem:[#allocation6 + $0x70] sm:$0xff]
        %v403 = vld [vmem:[#allocation6 + $0x78] sm:$0xff]
        %404 = vmatprep.subr.mxu0 0.0
        %405 = vmatpush1.msra.mxu0 %v388
        %406 = vmatprep.subr.mxu0 0.0
        %407 = vmatpush1.msra.mxu0 %v389
        %408 = vmatprep.subr.mxu0 0.0
        %409 = vmatpush1.msra.mxu0 %v390
        %410 = vmatprep.subr.mxu0 0.0
        %411 = vmatpush1.msra.mxu0 %v391
        %412 = vmatprep.subr.mxu0 0.0
        %413 = vmatpush1.msra.mxu0 %v392
        %414 = vmatprep.subr.mxu0 0.0
        %415 = vmatpush1.msra.mxu0 %v393
        %416 = vmatprep.subr.mxu0 0.0
        %417 = vmatpush1.msra.mxu0 %v394
        %418 = vmatprep.subr.mxu0 0.0
        %419 = vmatpush1.msra.mxu0 %v395
        %420 = vmatprep.subr.mxu0 0.0
        %421 = vmatpush1.msra.mxu0 %v396
        %422 = vmatprep.subr.mxu0 0.0
        %423 = vmatpush1.msra.mxu0 %v397
        %424 = vmatprep.subr.mxu0 0.0
        %425 = vmatpush1.msra.mxu0 %v398
        %426 = vmatprep.subr.mxu0 0.0
        %427 = vmatpush1.msra.mxu0 %v399
        %428 = vmatprep.subr.mxu0 0.0
        %429 = vmatpush1.msra.mxu0 %v400
        %430 = vmatprep.subr.mxu0 0.0
        %431 = vmatpush1.msra.mxu0 %v401
        %432 = vmatprep.subr.mxu0 0.0
        %433 = vmatpush1.msra.mxu0 %v402
        %434 = vmatprep.subr.mxu0 0.0
        %435 = vmatpush1.msra.mxu0 %v403
        %436 = vmatprep.subr.mxu0 0.0
        %437 = vmatpush1.msra.mxu0 0.0
        %438 = vmatprep.subr.mxu0 0.0
        %439 = vmatpush1.msra.mxu0 0.0
        %440 = vmatprep.subr.mxu0 0.0
        %441 = vmatpush1.msra.mxu0 0.0
        %442 = vmatprep.subr.mxu0 0.0
        %443 = vmatpush1.msra.mxu0 0.0
        %444 = vmatprep.subr.mxu0 0.0
        %445 = vmatpush1.msra.mxu0 0.0
        %446 = vmatprep.subr.mxu0 0.0
        %447 = vmatpush1.msra.mxu0 0.0
        %448 = vmatprep.subr.mxu0 0.0
        %449 = vmatpush1.msra.mxu0 0.0
        %450 = vmatprep.subr.mxu0 0.0
        %451 = vmatpush1.msra.mxu0 0.0
        %452 = vmatprep.subr.mxu0 0.0
        %453 = vmatpush1.msra.mxu0 0.0
        %454 = vmatprep.subr.mxu0 0.0
        %455 = vmatpush1.msra.mxu0 0.0
        %456 = vmatprep.subr.mxu0 0.0
        %457 = vmatpush1.msra.mxu0 0.0
        %458 = vmatprep.subr.mxu0 0.0
        %459 = vmatpush1.msra.mxu0 0.0
        %460 = vmatprep.subr.mxu0 0.0
        %461 = vmatpush1.msra.mxu0 0.0
        %462 = vmatprep.subr.mxu0 0.0
        %463 = vmatpush1.msra.mxu0 0.0
        %464 = vmatprep.subr.mxu0 0.0
        %465 = vmatpush1.msra.mxu0 0.0
        %466 = vmatprep.subr.mxu0 0.0
        %467 = vmatpush1.msra.mxu0 0.0
        %468 = vmatprep.mubr.f32.mxu0 0.0
        %469 = vmatmul.mubr.f32.gmra.mrb[0].mxu0 %v380
        %v470 = vpop.f32.mrb[0].mxu0
        %v471 = vadd.f32 0.0, %v470
        %v472 = vpop.f32.mrb[0].mxu0
        %473 = vmatprep.mubr.f32.mxu0 0.0
        %474 = vmatmul.mubr.f32.gmra.mrb[0].mxu0 %v381
        %v475 = vpop.f32.mrb[0].mxu0
        %v476 = vadd.f32 0.0, %v475
        %v477 = vpop.f32.mrb[0].mxu0
        %478 = vmatprep.mubr.f32.mxu0 0.0
        %479 = vmatmul.mubr.f32.gmra.mrb[0].mxu0 %v382
        %v480 = vpop.f32.mrb[0].mxu0
        %v481 = vadd.f32 0.0, %v480
        %v482 = vpop.f32.mrb[0].mxu0
        %483 = vmatprep.mubr.f32.mxu0 0.0
        %484 = vmatmul.mubr.f32.gmra.mrb[0].mxu0 %v383
        %v485 = vpop.f32.mrb[0].mxu0
        %v486 = vadd.f32 0.0, %v485
        %v487 = vpop.f32.mrb[0].mxu0
        %488 = vmatprep.mubr.f32.mxu0 0.0
        %489 = vmatmul.mubr.f32.gmra.mrb[0].mxu0 %v384
        %v490 = vpop.f32.mrb[0].mxu0
        %v491 = vadd.f32 0.0, %v490
        %v492 = vpop.f32.mrb[0].mxu0
        %493 = vmatprep.mubr.f32.mxu0 0.0
        %494 = vmatmul.mubr.f32.gmra.mrb[0].mxu0 %v385
        %v495 = vpop.f32.mrb[0].mxu0
        %v496 = vadd.f32 0.0, %v495
        %v497 = vpop.f32.mrb[0].mxu0
        %498 = vmatprep.mubr.f32.mxu0 0.0
        %499 = vmatmul.mubr.f32.gmra.mrb[0].mxu0 %v386
        %v500 = vpop.f32.mrb[0].mxu0
        %v501 = vadd.f32 0.0, %v500
        %v502 = vpop.f32.mrb[0].mxu0
        %503 = vmatprep.mubr.f32.mxu0 0.0
        %504 = vmatmul.mubr.f32.gmra.mrb[0].mxu0 %v387
        %v505 = vpop.f32.mrb[0].mxu0
        %v506 = vadd.f32 0.0, %v505
        %v507 = vpop.f32.mrb[0].mxu0
        %508 = vdwg.mxu0
        %509 = vmatprep.subr.mxu0 0.0
        %510 = vmatpush1.msra.mxu0 %v364
        %511 = vmatprep.subr.mxu0 0.0
        %512 = vmatpush1.msra.mxu0 %v365
        %513 = vmatprep.subr.mxu0 0.0
        %514 = vmatpush1.msra.mxu0 %v366
        %515 = vmatprep.subr.mxu0 0.0
        %516 = vmatpush1.msra.mxu0 %v367
        %517 = vmatprep.subr.mxu0 0.0
        %518 = vmatpush1.msra.mxu0 %v368
        %519 = vmatprep.subr.mxu0 0.0
        %520 = vmatpush1.msra.mxu0 %v369
        %521 = vmatprep.subr.mxu0 0.0
        %522 = vmatpush1.msra.mxu0 %v370
        %523 = vmatprep.subr.mxu0 0.0
        %524 = vmatpush1.msra.mxu0 %v371
        %525 = vmatprep.subr.mxu0 0.0
        %526 = vmatpush1.msra.mxu0 %v372
        %527 = vmatprep.subr.mxu0 0.0
        %528 = vmatpush1.msra.mxu0 %v373
        %529 = vmatprep.subr.mxu0 0.0
        %530 = vmatpush1.msra.mxu0 %v374
        %531 = vmatprep.subr.mxu0 0.0
        %532 = vmatpush1.msra.mxu0 %v375
        %533 = vmatprep.subr.mxu0 0.0
        %534 = vmatpush1.msra.mxu0 %v376
        %535 = vmatprep.subr.mxu0 0.0
        %536 = vmatpush1.msra.mxu0 %v377
        %537 = vmatprep.subr.mxu0 0.0
        %538 = vmatpush1.msra.mxu0 %v378
        %539 = vmatprep.subr.mxu0 0.0
        %540 = vmatpush1.msra.mxu0 %v379
        %541 = vmatprep.subr.mxu0 0.0
        %542 = vmatpush1.msra.mxu0 0.0
        %543 = vmatprep.subr.mxu0 0.0
        %544 = vmatpush1.msra.mxu0 0.0
        %545 = vmatprep.subr.mxu0 0.0
        %546 = vmatpush1.msra.mxu0 0.0
        %547 = vmatprep.subr.mxu0 0.0
        %548 = vmatpush1.msra.mxu0 0.0
        %549 = vmatprep.subr.mxu0 0.0
        %550 = vmatpush1.msra.mxu0 0.0
        %551 = vmatprep.subr.mxu0 0.0
        %552 = vmatpush1.msra.mxu0 0.0
        %553 = vmatprep.subr.mxu0 0.0
        %554 = vmatpush1.msra.mxu0 0.0
        %555 = vmatprep.subr.mxu0 0.0
        %556 = vmatpush1.msra.mxu0 0.0
        %557 = vmatprep.subr.mxu0 0.0
        %558 = vmatpush1.msra.mxu0 0.0
        %559 = vmatprep.subr.mxu0 0.0
        %560 = vmatpush1.msra.mxu0 0.0
        %561 = vmatprep.subr.mxu0 0.0
        %562 = vmatpush1.msra.mxu0 0.0
        %563 = vmatprep.subr.mxu0 0.0
        %564 = vmatpush1.msra.mxu0 0.0
        %565 = vmatprep.subr.mxu0 0.0
        %566 = vmatpush1.msra.mxu0 0.0
        %567 = vmatprep.subr.mxu0 0.0
        %568 = vmatpush1.msra.mxu0 0.0
        %569 = vmatprep.subr.mxu0 0.0
        %570 = vmatpush1.msra.mxu0 0.0
        %571 = vmatprep.subr.mxu0 0.0
        %572 = vmatpush1.msra.mxu0 0.0
        %573 = vmatprep.mubr.f32.mxu0 0.0
        %574 = vmatmul.mubr.f32.gmra.mrb[0].mxu0 %v356
        %v575 = vpop.f32.mrb[0].mxu0
        %v576 = vadd.f32 %v471, %v575
        %v577 = vpop.f32.mrb[0].mxu0
        %578 = vmatprep.mubr.f32.mxu0 0.0
        %579 = vmatmul.mubr.f32.gmra.mrb[0].mxu0 %v357
        %v580 = vpop.f32.mrb[0].mxu0
        %v581 = vadd.f32 %v476, %v580
        %v582 = vpop.f32.mrb[0].mxu0
        %583 = vmatprep.mubr.f32.mxu0 0.0
        %584 = vmatmul.mubr.f32.gmra.mrb[0].mxu0 %v358
        %v585 = vpop.f32.mrb[0].mxu0
        %v586 = vadd.f32 %v481, %v585
        %v587 = vpop.f32.mrb[0].mxu0
        %588 = vmatprep.mubr.f32.mxu0 0.0
        %589 = vmatmul.mubr.f32.gmra.mrb[0].mxu0 %v359
        %v590 = vpop.f32.mrb[0].mxu0
        %v591 = vadd.f32 %v486, %v590
        %v592 = vpop.f32.mrb[0].mxu0
        %593 = vmatprep.mubr.f32.mxu0 0.0
        %594 = vmatmul.mubr.f32.gmra.mrb[0].mxu0 %v360
        %v595 = vpop.f32.mrb[0].mxu0
        %v596 = vadd.f32 %v491, %v595
        %v597 = vpop.f32.mrb[0].mxu0
        %598 = vmatprep.mubr.f32.mxu0 0.0
        %599 = vmatmul.mubr.f32.gmra.mrb[0].mxu0 %v361
        %v600 = vpop.f32.mrb[0].mxu0
        %v601 = vadd.f32 %v496, %v600
        %v602 = vpop.f32.mrb[0].mxu0
        %603 = vmatprep.mubr.f32.mxu0 0.0
        %604 = vmatmul.mubr.f32.gmra.mrb[0].mxu0 %v362
        %v605 = vpop.f32.mrb[0].mxu0
        %v606 = vadd.f32 %v501, %v605
        %v607 = vpop.f32.mrb[0].mxu0
        %608 = vmatprep.mubr.f32.mxu0 0.0
        %609 = vmatmul.mubr.f32.gmra.mrb[0].mxu0 %v363
        %v610 = vpop.f32.mrb[0].mxu0
        %v611 = vadd.f32 %v506, %v610
        %v612 = vpop.f32.mrb[0].mxu0
        %613 = vdwg.mxu0
        %v614 = vld [vmem:[%s4] sm:$0x1]
        %v616 = vlaneseq
        %v617 = vshrl.u32 %v616, 7
        %v618 = vsub.s32 0, %v617
        %v619 = vrot.slane %v614, %v618
        %v621 = vadd.f32 %v576, %v619
        %v622 = vadd.f32 %v581, %v619
        %v623 = vadd.f32 %v586, %v619
        %v624 = vadd.f32 %v591, %v619
        %v625 = vadd.f32 %v596, %v619
        %v626 = vadd.f32 %v601, %v619
        %v627 = vadd.f32 %v606, %v619
        %v628 = vadd.f32 %v611, %v619
        %v629 = vmax.f32 %v621, 0.0
        %v630 = vmax.f32 %v622, 0.0
        %v631 = vmax.f32 %v623, 0.0
        %v632 = vmax.f32 %v624, 0.0
        %v633 = vmax.f32 %v625, 0.0
        %v634 = vmax.f32 %v626, 0.0
        %v635 = vmax.f32 %v627, 0.0
        %v636 = vmax.f32 %v628, 0.0
        %v637 = vld [vmem:[%s5] sm:$0xff]
        %v638 = vld [vmem:[%s5 + $0x8] sm:$0xff]
        %v639 = vld [vmem:[%s5 + $0x10] sm:$0xff]
        %v640 = vld [vmem:[%s5 + $0x18] sm:$0xff]
        %v641 = vld [vmem:[%s5 + $0x20] sm:$0xff]
        %v642 = vld [vmem:[%s5 + $0x28] sm:$0xff]
        %v643 = vld [vmem:[%s5 + $0x30] sm:$0xff]
        %v644 = vld [vmem:[%s5 + $0x38] sm:$0xff]
        %v645 = vld [vmem:[%s5 + $0x40] sm:$0xff]
        %v646 = vld [vmem:[%s5 + $0x48] sm:$0xff]
        %v647 = vld [vmem:[%s5 + $0x50] sm:$0xff]
        %v648 = vld [vmem:[%s5 + $0x58] sm:$0xff]
        %v649 = vld [vmem:[%s5 + $0x60] sm:$0xff]
        %v650 = vld [vmem:[%s5 + $0x68] sm:$0xff]
        %v651 = vld [vmem:[%s5 + $0x70] sm:$0xff]
        %v652 = vld [vmem:[%s5 + $0x78] sm:$0xff]
        %v653 = vld [vmem:[%s6] sm:$0x1]
        %v655 = vlaneseq
        %v656 = vshrl.u32 %v655, 7
        %v657 = vsub.s32 0, %v656
        %v658 = vrot.slane %v653, %v657
        %660 = vmatprep.subr.mxu0 0.0
        %661 = vmatpush1.msra.mxu0 %v637
        %662 = vmatprep.subr.mxu0 0.0
        %663 = vmatpush1.msra.mxu0 %v638
        %664 = vmatprep.subr.mxu0 0.0
        %665 = vmatpush1.msra.mxu0 %v639
        %666 = vmatprep.subr.mxu0 0.0
        %667 = vmatpush1.msra.mxu0 %v640
        %668 = vmatprep.subr.mxu0 0.0
        %669 = vmatpush1.msra.mxu0 %v641
        %670 = vmatprep.subr.mxu0 0.0
        %671 = vmatpush1.msra.mxu0 %v642
        %672 = vmatprep.subr.mxu0 0.0
        %673 = vmatpush1.msra.mxu0 %v643
        %674 = vmatprep.subr.mxu0 0.0
        %675 = vmatpush1.msra.mxu0 %v644
        %676 = vmatprep.subr.mxu0 0.0
        %677 = vmatpush1.msra.mxu0 %v645
        %678 = vmatprep.subr.mxu0 0.0
        %679 = vmatpush1.msra.mxu0 %v646
        %680 = vmatprep.subr.mxu0 0.0
        %681 = vmatpush1.msra.mxu0 %v647
        %682 = vmatprep.subr.mxu0 0.0
        %683 = vmatpush1.msra.mxu0 %v648
        %684 = vmatprep.subr.mxu0 0.0
        %685 = vmatpush1.msra.mxu0 %v649
        %686 = vmatprep.subr.mxu0 0.0
        %687 = vmatpush1.msra.mxu0 %v650
        %688 = vmatprep.subr.mxu0 0.0
        %689 = vmatpush1.msra.mxu0 %v651
        %690 = vmatprep.subr.mxu0 0.0
        %691 = vmatpush1.msra.mxu0 %v652
        %692 = vmatprep.subr.mxu0 0.0
        %693 = vmatpush1.msra.mxu0 0.0
        %694 = vmatprep.subr.mxu0 0.0
        %695 = vmatpush1.msra.mxu0 0.0
        %696 = vmatprep.subr.mxu0 0.0
        %697 = vmatpush1.msra.mxu0 0.0
        %698 = vmatprep.subr.mxu0 0.0
        %699 = vmatpush1.msra.mxu0 0.0
        %700 = vmatprep.subr.mxu0 0.0
        %701 = vmatpush1.msra.mxu0 0.0
        %702 = vmatprep.subr.mxu0 0.0
        %703 = vmatpush1.msra.mxu0 0.0
        %704 = vmatprep.subr.mxu0 0.0
        %705 = vmatpush1.msra.mxu0 0.0
        %706 = vmatprep.subr.mxu0 0.0
        %707 = vmatpush1.msra.mxu0 0.0
        %708 = vmatprep.subr.mxu0 0.0
        %709 = vmatpush1.msra.mxu0 0.0
        %710 = vmatprep.subr.mxu0 0.0
        %711 = vmatpush1.msra.mxu0 0.0
        %712 = vmatprep.subr.mxu0 0.0
        %713 = vmatpush1.msra.mxu0 0.0
        %714 = vmatprep.subr.mxu0 0.0
        %715 = vmatpush1.msra.mxu0 0.0
        %716 = vmatprep.subr.mxu0 0.0
        %717 = vmatpush1.msra.mxu0 0.0
        %718 = vmatprep.subr.mxu0 0.0
        %719 = vmatpush1.msra.mxu0 0.0
        %720 = vmatprep.subr.mxu0 0.0
        %721 = vmatpush1.msra.mxu0 0.0
        %722 = vmatprep.subr.mxu0 0.0
        %723 = vmatpush1.msra.mxu0 0.0
        %724 = vmatprep.mubr.f32.mxu0 0.0
        %725 = vmatmul.mubr.f32.gmra.mrb[0].mxu0 %v629
        %v726 = vpop.f32.mrb[0].mxu0
        %v727 = vadd.f32 %v658, %v726
        %v728 = vpop.f32.mrb[0].mxu0
        %729 = vmatprep.mubr.f32.mxu0 0.0
        %730 = vmatmul.mubr.f32.gmra.mrb[0].mxu0 %v630
        %v731 = vpop.f32.mrb[0].mxu0
        %v732 = vadd.f32 %v658, %v731
        %v733 = vpop.f32.mrb[0].mxu0
        %734 = vmatprep.mubr.f32.mxu0 0.0
        %735 = vmatmul.mubr.f32.gmra.mrb[0].mxu0 %v631
        %v736 = vpop.f32.mrb[0].mxu0
        %v737 = vadd.f32 %v658, %v736
        %v738 = vpop.f32.mrb[0].mxu0
        %739 = vmatprep.mubr.f32.mxu0 0.0
        %740 = vmatmul.mubr.f32.gmra.mrb[0].mxu0 %v632
        %v741 = vpop.f32.mrb[0].mxu0
        %v742 = vadd.f32 %v658, %v741
        %v743 = vpop.f32.mrb[0].mxu0
        %744 = vmatprep.mubr.f32.mxu0 0.0
        %745 = vmatmul.mubr.f32.gmra.mrb[0].mxu0 %v633
        %v746 = vpop.f32.mrb[0].mxu0
        %v747 = vadd.f32 %v658, %v746
        %v748 = vpop.f32.mrb[0].mxu0
        %749 = vmatprep.mubr.f32.mxu0 0.0
        %750 = vmatmul.mubr.f32.gmra.mrb[0].mxu0 %v634
        %v751 = vpop.f32.mrb[0].mxu0
        %v752 = vadd.f32 %v658, %v751
        %v753 = vpop.f32.mrb[0].mxu0
        %754 = vmatprep.mubr.f32.mxu0 0.0
        %755 = vmatmul.mubr.f32.gmra.mrb[0].mxu0 %v635
        %v756 = vpop.f32.mrb[0].mxu0
        %v757 = vadd.f32 %v658, %v756
        %v758 = vpop.f32.mrb[0].mxu0
        %759 = vmatprep.mubr.f32.mxu0 0.0
        %760 = vmatmul.mubr.f32.gmra.mrb[0].mxu0 %v636
        %v761 = vpop.f32.mrb[0].mxu0
        %v762 = vadd.f32 %v658, %v761
        %v763 = vpop.f32.mrb[0].mxu0
        %764 = vdwg.mxu0
        %vm765 = vcmask 31744
        %766 = vst.msk [vmem:[%s354] sm:$0xff] %vm765, %v727
        %767 = vst.msk [vmem:[%s354 + $0x8] sm:$0xff] %vm765, %v732
        %768 = vst.msk [vmem:[%s354 + $0x10] sm:$0xff] %vm765, %v737
        %769 = vst.msk [vmem:[%s354 + $0x18] sm:$0xff] %vm765, %v742
        %770 = vst.msk [vmem:[%s354 + $0x20] sm:$0xff] %vm765, %v747
        %771 = vst.msk [vmem:[%s354 + $0x28] sm:$0xff] %vm765, %v752
        %772 = vst.msk [vmem:[%s354 + $0x30] sm:$0xff] %vm765, %v757
        %773 = vst.msk [vmem:[%s354 + $0x38] sm:$0xff] %vm765, %v762
        %s774 = smul.u32 8, %s24
        %p775 = scmp.lt.s32.totalorder %s774, 31
        %s776 = scalar_select %p775, %s774, 31
        %s777 = smul.addr %s776, 8
        %s778 = scalar_lea.vmem %s7, %s777
        // Predicated region
        $region61: #{tpu_custom_call.1} parent=47 // pred_check
          %p779 = pneg %p199
        $region62: #{tpu_custom_call.1} parent=47 // pred_check_branch
          %781 = sbr.rel (%p779) target = $region64
        $region63: #{tpu_custom_call.1} parent=47 // pred_region
          %s782 = smul.u32 8, %s24
        $region64: #{tpu_custom_call.1} parent=47 // pred_fallthru
          _
      $region48: #{tpu_custom_call.1} parent=5 // pred_fallthru
        _
      %p783 = scmp.le.s32.totalorder 2, %s19
      // Predicated region
      $region65: #{tpu_custom_call.1} parent=5 // pred_check
        %p784 = pneg %p783
      $region66: #{tpu_custom_call.1} parent=5 // pred_check_branch
        %786 = sbr.rel (%p784) target = $region68
      $region67: #{tpu_custom_call.1} parent=5 // pred_region
        %s787 = ssub.s32 %s19, 2
        // Predicated region
        $region69: #{tpu_custom_call.1} parent=67 // pred_check
          %p788 = pneg %p205
        $region70: #{tpu_custom_call.1} parent=67 // pred_check_branch
          %790 = sbr.rel (%p788) target = $region72
        $region71: #{tpu_custom_call.1} parent=67 // pred_region
          %s791 = smul.u32 8, %s25
          %p792 = scmp.lt.s32.totalorder %s791, 31
          %s793 = scalar_select %p792, %s791, 31
          %s794 = smul.addr %s793, 8
          %s795 = scalar_lea.vmem %s7, %s794
        $region72: #{tpu_custom_call.1} parent=67 // pred_fallthru
          _
      $region68: #{tpu_custom_call.1} parent=5 // pred_fallthru
        _
    $region6: #{tpu_custom_call.1} parent=1 // loop_footer
      %s23 = sadd.s32 1, %s19
    $region7: #{tpu_custom_call.1} parent=1 // loop_footer_branch
      %18 = sbr.rel target = $region3
    $region8: #{tpu_custom_call.1} parent=1 // loop_exit
      _
    %796 = vsyncpa [#allocation3], 1
    %s797 = scalar_lea.sflag [#allocation3], 1
    %798 = vsyncpa %s797, 1
    %799 = vsyncpa [#allocation5], 1
    %s800 = scalar_lea.sflag [#allocation5], 1
    %801 = vsyncpa %s800, 1

</llo_original>
